<compile_context>
chip_gen: v5e
topology: v5e:2x2
jax: 0.10.0
libtpu: 0.0.40
codegen_flags: <defaults>
</compile_context>

<pallas_src>
import functools

import jax
import jax.numpy as jnp
from jax import lax
from jax.experimental import pallas as pl
from jax.experimental.pallas import tpu as pltpu


# ----------------------------- fused kernel -------------------------------- #

def _attention_kernel(x_ref, wqkv_ref, wproj_ref, bproj_ref, o_ref,
                      qkv_scr, attn_scr, *, num_heads, scale):
    """One grid step == one batch element.

    Block shapes:
      x_ref: (1, N, C)   wqkv_ref: (3C, C)   wproj_ref: (C, C)   bproj_ref: (1, C)
      o_ref: (1, N, C)
    Scratch (VMEM, persists across grid steps, fully rewritten each step):
      qkv_scr: (N, 3C)   attn_scr: (N, C)
    Weights are in nn.Linear (out_features, in_features) layout.
    """
    N, C = x_ref.shape[1], x_ref.shape[2]
    D = C // num_heads
    dtype = x_ref.dtype

    x = x_ref[0]                                                   # (N, C)

    # (1) One full-width QKV matmul (transpose folded into the contraction, f32
    #     accumulate on the MXU). Result goes straight into VMEM scratch so no
    #     (N, 3C) value stays live across the head loop.
    qkv_scr[...] = lax.dot_general(
        x, wqkv_ref[...], (((1,), (1,)), ((), ())),
        preferred_element_type=jnp.float32).astype(dtype)          # (N, 3C)

    # (2) Per-head attention. Static offsets -> plain static slices of the scratch;
    #     each head's temporaries die at the attn_scr store.
    for h in range(num_heads):
        q = qkv_scr[:, h * D:(h + 1) * D] * scale                  # (N, D), pre-scaled
        k = qkv_scr[:, C + h * D:C + (h + 1) * D]                  # (N, D)
        v = qkv_scr[:, 2 * C + h * D:2 * C + (h + 1) * D]          # (N, D)

        # s = (q*scale) @ k^T  -- contract D on both operands, no explicit transpose.
        s = lax.dot_general(q, k, (((1,), (1,)), ((), ())),
                            preferred_element_type=jnp.float32)    # (N, N)
        s = s - jnp.max(s, axis=-1, keepdims=True)                 # stable softmax
        p = jnp.exp(s)
        l = jnp.sum(p, axis=-1, keepdims=True)                     # (N, 1)

        o = jnp.dot(p.astype(dtype), v,
                    preferred_element_type=jnp.float32)            # (N, D)
        o = o * pl.reciprocal(l, approx=False)                     # exact denominator

        attn_scr[:, h * D:(h + 1) * D] = o.astype(dtype)

    # (3) Single deep-K projection matmul + bias, straight to the output ref
    #     (one lane-dense (N, C) store per grid step).
    y = lax.dot_general(attn_scr[...], wproj_ref[...], (((1,), (1,)), ((), ())),
                        preferred_element_type=jnp.float32)        # (N, C)
    o_ref[0] = (y + bproj_ref[...].astype(jnp.float32)).astype(o_ref.dtype)


# ----------------------------- wrapper -------------------------------------- #

def _vmem_limit_bytes(N, C, itemsize):
    """Rough VMEM footprint estimate -> explicit scoped limit (v5e default is 16 MiB)."""
    weights = (3 * C * C + C * C + C) * itemsize          # single-buffered weights + bias
    io = 2 * (2 * N * C) * itemsize                       # double-buffered x / out blocks
    scratch = (3 * N * C + N * C) * itemsize              # qkv + attention staging
    temps = (N * N + 3 * N * C + N * C) * 4               # f32 scores / matmul results
    est = weights + io + scratch + temps
    # Clamp: at least 32 MiB, never above v7x's 64 MiB physical VMEM per TC.
    return int(min(64 * 1024 * 1024, max(32 * 1024 * 1024, 2 * est)))


def attention_forward(x, w_qkv, w_proj, b_proj, num_heads):
    """Full forward of the PyTorch Attention module. x: (B, N, C)."""
    B, N, C = x.shape
    assert C % num_heads == 0
    D = C // num_heads
    scale = D ** (-0.5)

    kernel = functools.partial(_attention_kernel, num_heads=num_heads, scale=scale)

    return pl.pallas_call(
        kernel,
        out_shape=jax.ShapeDtypeStruct((B, N, C), x.dtype),
        grid=(B,),
        in_specs=[
            pl.BlockSpec((1, N, C), lambda b: (b, 0, 0)),            # x: one batch / step
            pl.BlockSpec((3 * C, C), lambda b: (0, 0),
                         pipeline_mode=pl.Buffered(1)),              # W_qkv, single-buffered
            pl.BlockSpec((C, C), lambda b: (0, 0),
                         pipeline_mode=pl.Buffered(1)),              # W_proj, single-buffered
            pl.BlockSpec((1, C), lambda b: (0, 0)),                  # proj bias
        ],
        out_specs=pl.BlockSpec((1, N, C), lambda b: (b, 0, 0)),
        scratch_shapes=[
            pltpu.VMEM((N, 3 * C), x.dtype),                         # staged QKV
            pltpu.VMEM((N, C), x.dtype),                             # staged attention out
        ],
        compiler_params=pltpu.CompilerParams(
            dimension_semantics=("parallel",),                        # batches across TCs
            vmem_limit_bytes=_vmem_limit_bytes(N, C, x.dtype.itemsize)),
    )(x, w_qkv, w_proj, b_proj.reshape(1, C))


# ----------------------------- reference (pure JAX) ------------------------- #

def attention_reference(x, w_qkv, w_proj, b_proj, num_heads):
    B, N, C = x.shape
    D = C // num_heads
    scale = D ** (-0.5)
    hp = lax.Precision.HIGHEST
    qkv = jnp.einsum("bnc,kc->bnk", x, w_qkv, precision=hp)
    qkv = qkv.reshape(B, N, 3, num_heads, D).transpose(2, 0, 3, 1, 4)
    q, k, v = qkv[0], qkv[1], qkv[2]
    attn = jnp.einsum("bhnd,bhmd->bhnm", q, k, precision=hp) * scale
    attn = jax.nn.softmax(attn, axis=-1)
    out = jnp.einsum("bhnm,bhmd->bhnd", attn, v, precision=hp)
    out = out.transpose(0, 2, 1, 3).reshape(B, N, C)
    return jnp.einsum("bnc,dc->bnd", out, w_proj, precision=hp) + b_proj


# ----------------------------- main ------------------------------------------ #

if __name__ == "__main__":
    B, N, C = 2, 8, 32
    num_heads = 8          # head_dim = 4 (module default num_heads=8)

    key = jax.random.PRNGKey(0)
    kx, kqkv, kproj, kb = jax.random.split(key, 4)

    x = jax.random.normal(kx, (B, N, C), dtype=jnp.float32)
    # nn.Linear weight layout: (out_features, in_features); qkv_bias=False
    w_qkv = jax.random.normal(kqkv, (3 * C, C), dtype=jnp.float32) * 0.1
    w_proj = jax.random.normal(kproj, (C, C), dtype=jnp.float32) * 0.1
    b_proj = jax.random.normal(kb, (C,), dtype=jnp.float32) * 0.1

    out = jax.jit(attention_forward, static_argnums=4)(x, w_qkv, w_proj, b_proj, num_heads)
    out = jax.block_until_ready(out)

    ref = attention_reference(x, w_qkv, w_proj, b_proj, num_heads)
    assert out.shape == (B, N, C)
    err = float(jnp.max(jnp.abs(out - ref)))
    assert jnp.allclose(out, ref, atol=2e-3, rtol=2e-3), err

    print("KERNEL_OK")
</pallas_src>

<mosaic_0001>
module attributes {stable_mosaic.version = 11 : i64} {
  func.func @_attention_kernel(%arg0: i32, %arg1: memref<1x8x32xf32, #tpu.memory_space<vmem>>, %arg2: memref<96x32xf32, #tpu.memory_space<vmem>>, %arg3: memref<32x32xf32, #tpu.memory_space<vmem>>, %arg4: memref<1x32xf32, #tpu.memory_space<vmem>>, %arg5: memref<1x8x32xf32, #tpu.memory_space<vmem>>, %arg6: memref<8x96xf32, #tpu.memory_space<vmem>>, %arg7: memref<8x32xf32, #tpu.memory_space<vmem>>) attributes {dimension_semantics = [#tpu.dimension_semantics<parallel>], iteration_bounds = array<i64: 2>, scalar_prefetch = 0 : i64, scratch_operands = 2 : i64, tpu.core_type = #tpu.core_type<tc>, window_params = [{transform_indices = @transform_0, window_bounds = array<i64: 1, 8, 32>}, {pipeline_mode = #tpu.pipeline_mode<synchronous>, transform_indices = @transform_1, window_bounds = array<i64: 96, 32>}, {pipeline_mode = #tpu.pipeline_mode<synchronous>, transform_indices = @transform_2, window_bounds = array<i64: 32, 32>}, {pipeline_mode = #tpu.pipeline_mode<synchronous>, transform_indices = @transform_3, window_bounds = array<i64: 1, 32>}, {transform_indices = @transform_4, window_bounds = array<i64: 1, 8, 32>}]} {
    %c0 = arith.constant 0 : index
    %c0_0 = arith.constant 0 : index
    %c0_1 = arith.constant 0 : index
    %0 = vector.load %arg1[%c0, %c0_0, %c0_1] : memref<1x8x32xf32, #tpu.memory_space<vmem>>, vector<1x8x32xf32>
    %1 = vector.shape_cast %0 : vector<1x8x32xf32> to vector<8x32xf32>
    %c0_2 = arith.constant 0 : index
    %c0_3 = arith.constant 0 : index
    %2 = vector.load %arg2[%c0_2, %c0_3] : memref<96x32xf32, #tpu.memory_space<vmem>>, vector<96x32xf32>
    %cst = arith.constant dense<0.000000e+00> : vector<8x96xf32>
    %3 = tpu.matmul %1, %2, %cst {dimension_numbers = #tpu.dot_dimension_numbers<[1], [1], [0], [0], [0, 0, 1, 0], [], []>} : vector<8x32xf32>, vector<96x32xf32>, vector<8x96xf32> -> vector<8x96xf32>
    %c0_4 = arith.constant 0 : index
    %c0_5 = arith.constant 0 : index
    %4 = vector.load %arg6[%c0_4, %c0_5] : memref<8x96xf32, #tpu.memory_space<vmem>>, vector<8x96xf32>
    tpu.vector_store %arg6[%c0_4, %c0_5], %3 {strides = array<i32>} : memref<8x96xf32, #tpu.memory_space<vmem>>, vector<8x96xf32>,
    %c0_6 = arith.constant 0 : index
    %c0_7 = arith.constant 0 : index
    %5 = vector.load %arg6[%c0_6, %c0_7] : memref<8x96xf32, #tpu.memory_space<vmem>>, vector<8x4xf32>
    %cst_8 = arith.constant 5.000000e-01 : f32
    %6 = vector.broadcast %cst_8 : f32 to vector<8x4xf32>
    %7 = arith.mulf %5, %6 : vector<8x4xf32>
    %c0_9 = arith.constant 0 : index
    %c32 = arith.constant 32 : index
    %8 = vector.load %arg6[%c0_9, %c32] : memref<8x96xf32, #tpu.memory_space<vmem>>, vector<8x4xf32>
    %c0_10 = arith.constant 0 : index
    %c64 = arith.constant 64 : index
    %9 = vector.load %arg6[%c0_10, %c64] : memref<8x96xf32, #tpu.memory_space<vmem>>, vector<8x4xf32>
    %cst_11 = arith.constant dense<0.000000e+00> : vector<8x8xf32>
    %10 = tpu.matmul %7, %8, %cst_11 {dimension_numbers = #tpu.dot_dimension_numbers<[1], [1], [0], [0], [0, 0, 1, 0], [], []>} : vector<8x4xf32>, vector<8x4xf32>, vector<8x8xf32> -> vector<8x8xf32>
    %cst_12 = arith.constant dense<0xFF800000> : vector<8xf32>
    %11 = vector.multi_reduction <maximumf>, %10, %cst_12 [1] : vector<8x8xf32> to vector<8xf32>
    %12 = vector.shape_cast %11 : vector<8xf32> to vector<8x1xf32>
    %13 = vector.broadcast %12 : vector<8x1xf32> to vector<8x8xf32>
    %14 = arith.subf %10, %13 : vector<8x8xf32>
    %15 = math.exp %14 : vector<8x8xf32>
    %cst_13 = arith.constant dense<0.000000e+00> : vector<8xf32>
    %16 = vector.multi_reduction <add>, %15, %cst_13 [1] : vector<8x8xf32> to vector<8xf32>
    %17 = vector.shape_cast %16 : vector<8xf32> to vector<8x1xf32>
    %cst_14 = arith.constant dense<0.000000e+00> : vector<8x4xf32>
    %18 = tpu.matmul %15, %9, %cst_14 {dimension_numbers = #tpu.dot_dimension_numbers<[1], [0], [0], [1], [0, 0, 1, 1], [], []>} : vector<8x8xf32>, vector<8x4xf32>, vector<8x4xf32> -> vector<8x4xf32>
    %19 = tpu.reciprocal %17 : vector<8x1xf32> -> vector<8x1xf32>
    %20 = vector.broadcast %19 : vector<8x1xf32> to vector<8x4xf32>
    %21 = arith.mulf %18, %20 : vector<8x4xf32>
    %c0_15 = arith.constant 0 : index
    %c0_16 = arith.constant 0 : index
    %22 = vector.load %arg7[%c0_15, %c0_16] : memref<8x32xf32, #tpu.memory_space<vmem>>, vector<8x4xf32>
    tpu.vector_store %arg7[%c0_15, %c0_16], %21 {strides = array<i32>} : memref<8x32xf32, #tpu.memory_space<vmem>>, vector<8x4xf32>,
    %c0_17 = arith.constant 0 : index
    %c4 = arith.constant 4 : index
    %23 = vector.load %arg6[%c0_17, %c4] : memref<8x96xf32, #tpu.memory_space<vmem>>, vector<8x4xf32>
    %cst_18 = arith.constant 5.000000e-01 : f32
    %24 = vector.broadcast %cst_18 : f32 to vector<8x4xf32>
    %25 = arith.mulf %23, %24 : vector<8x4xf32>
    %c0_19 = arith.constant 0 : index
    %c36 = arith.constant 36 : index
    %26 = vector.load %arg6[%c0_19, %c36] : memref<8x96xf32, #tpu.memory_space<vmem>>, vector<8x4xf32>
    %c0_20 = arith.constant 0 : index
    %c68 = arith.constant 68 : index
    %27 = vector.load %arg6[%c0_20, %c68] : memref<8x96xf32, #tpu.memory_space<vmem>>, vector<8x4xf32>
    %cst_21 = arith.constant dense<0.000000e+00> : vector<8x8xf32>
    %28 = tpu.matmul %25, %26, %cst_21 {dimension_numbers = #tpu.dot_dimension_numbers<[1], [1], [0], [0], [0, 0, 1, 0], [], []>} : vector<8x4xf32>, vector<8x4xf32>, vector<8x8xf32> -> vector<8x8xf32>
    %cst_22 = arith.constant dense<0xFF800000> : vector<8xf32>
    %29 = vector.multi_reduction <maximumf>, %28, %cst_22 [1] : vector<8x8xf32> to vector<8xf32>
    %30 = vector.shape_cast %29 : vector<8xf32> to vector<8x1xf32>
    %31 = vector.broadcast %30 : vector<8x1xf32> to vector<8x8xf32>
    %32 = arith.subf %28, %31 : vector<8x8xf32>
    %33 = math.exp %32 : vector<8x8xf32>
    %cst_23 = arith.constant dense<0.000000e+00> : vector<8xf32>
    %34 = vector.multi_reduction <add>, %33, %cst_23 [1] : vector<8x8xf32> to vector<8xf32>
    %35 = vector.shape_cast %34 : vector<8xf32> to vector<8x1xf32>
    %cst_24 = arith.constant dense<0.000000e+00> : vector<8x4xf32>
    %36 = tpu.matmul %33, %27, %cst_24 {dimension_numbers = #tpu.dot_dimension_numbers<[1], [0], [0], [1], [0, 0, 1, 1], [], []>} : vector<8x8xf32>, vector<8x4xf32>, vector<8x4xf32> -> vector<8x4xf32>
    %37 = tpu.reciprocal %35 : vector<8x1xf32> -> vector<8x1xf32>
    %38 = vector.broadcast %37 : vector<8x1xf32> to vector<8x4xf32>
    %39 = arith.mulf %36, %38 : vector<8x4xf32>
    %c0_25 = arith.constant 0 : index
    %c4_26 = arith.constant 4 : index
    %40 = vector.load %arg7[%c0_25, %c4_26] : memref<8x32xf32, #tpu.memory_space<vmem>>, vector<8x4xf32>
    tpu.vector_store %arg7[%c0_25, %c4_26], %39 {strides = array<i32>} : memref<8x32xf32, #tpu.memory_space<vmem>>, vector<8x4xf32>,
    %c0_27 = arith.constant 0 : index
    %c8 = arith.constant 8 : index
    %41 = vector.load %arg6[%c0_27, %c8] : memref<8x96xf32, #tpu.memory_space<vmem>>, vector<8x4xf32>
    %cst_28 = arith.constant 5.000000e-01 : f32
    %42 = vector.broadcast %cst_28 : f32 to vector<8x4xf32>
    %43 = arith.mulf %41, %42 : vector<8x4xf32>
    %c0_29 = arith.constant 0 : index
    %c40 = arith.constant 40 : index
    %44 = vector.load %arg6[%c0_29, %c40] : memref<8x96xf32, #tpu.memory_space<vmem>>, vector<8x4xf32>
    %c0_30 = arith.constant 0 : index
    %c72 = arith.constant 72 : index
    %45 = vector.load %arg6[%c0_30, %c72] : memref<8x96xf32, #tpu.memory_space<vmem>>, vector<8x4xf32>
    %cst_31 = arith.constant dense<0.000000e+00> : vector<8x8xf32>
    %46 = tpu.matmul %43, %44, %cst_31 {dimension_numbers = #tpu.dot_dimension_numbers<[1], [1], [0], [0], [0, 0, 1, 0], [], []>} : vector<8x4xf32>, vector<8x4xf32>, vector<8x8xf32> -> vector<8x8xf32>
    %cst_32 = arith.constant dense<0xFF800000> : vector<8xf32>
    %47 = vector.multi_reduction <maximumf>, %46, %cst_32 [1] : vector<8x8xf32> to vector<8xf32>
    %48 = vector.shape_cast %47 : vector<8xf32> to vector<8x1xf32>
    %49 = vector.broadcast %48 : vector<8x1xf32> to vector<8x8xf32>
    %50 = arith.subf %46, %49 : vector<8x8xf32>
    %51 = math.exp %50 : vector<8x8xf32>
    %cst_33 = arith.constant dense<0.000000e+00> : vector<8xf32>
    %52 = vector.multi_reduction <add>, %51, %cst_33 [1] : vector<8x8xf32> to vector<8xf32>
    %53 = vector.shape_cast %52 : vector<8xf32> to vector<8x1xf32>
    %cst_34 = arith.constant dense<0.000000e+00> : vector<8x4xf32>
    %54 = tpu.matmul %51, %45, %cst_34 {dimension_numbers = #tpu.dot_dimension_numbers<[1], [0], [0], [1], [0, 0, 1, 1], [], []>} : vector<8x8xf32>, vector<8x4xf32>, vector<8x4xf32> -> vector<8x4xf32>
    %55 = tpu.reciprocal %53 : vector<8x1xf32> -> vector<8x1xf32>
    %56 = vector.broadcast %55 : vector<8x1xf32> to vector<8x4xf32>
    %57 = arith.mulf %54, %56 : vector<8x4xf32>
    %c0_35 = arith.constant 0 : index
    %c8_36 = arith.constant 8 : index
    %58 = vector.load %arg7[%c0_35, %c8_36] : memref<8x32xf32, #tpu.memory_space<vmem>>, vector<8x4xf32>
    tpu.vector_store %arg7[%c0_35, %c8_36], %57 {strides = array<i32>} : memref<8x32xf32, #tpu.memory_space<vmem>>, vector<8x4xf32>,
    %c0_37 = arith.constant 0 : index
    %c12 = arith.constant 12 : index
    %59 = vector.load %arg6[%c0_37, %c12] : memref<8x96xf32, #tpu.memory_space<vmem>>, vector<8x4xf32>
    %cst_38 = arith.constant 5.000000e-01 : f32
    %60 = vector.broadcast %cst_38 : f32 to vector<8x4xf32>
    %61 = arith.mulf %59, %60 : vector<8x4xf32>
    %c0_39 = arith.constant 0 : index
    %c44 = arith.constant 44 : index
    %62 = vector.load %arg6[%c0_39, %c44] : memref<8x96xf32, #tpu.memory_space<vmem>>, vector<8x4xf32>
    %c0_40 = arith.constant 0 : index
    %c76 = arith.constant 76 : index
    %63 = vector.load %arg6[%c0_40, %c76] : memref<8x96xf32, #tpu.memory_space<vmem>>, vector<8x4xf32>
    %cst_41 = arith.constant dense<0.000000e+00> : vector<8x8xf32>
    %64 = tpu.matmul %61, %62, %cst_41 {dimension_numbers = #tpu.dot_dimension_numbers<[1], [1], [0], [0], [0, 0, 1, 0], [], []>} : vector<8x4xf32>, vector<8x4xf32>, vector<8x8xf32> -> vector<8x8xf32>
    %cst_42 = arith.constant dense<0xFF800000> : vector<8xf32>
    %65 = vector.multi_reduction <maximumf>, %64, %cst_42 [1] : vector<8x8xf32> to vector<8xf32>
    %66 = vector.shape_cast %65 : vector<8xf32> to vector<8x1xf32>
    %67 = vector.broadcast %66 : vector<8x1xf32> to vector<8x8xf32>
    %68 = arith.subf %64, %67 : vector<8x8xf32>
    %69 = math.exp %68 : vector<8x8xf32>
    %cst_43 = arith.constant dense<0.000000e+00> : vector<8xf32>
    %70 = vector.multi_reduction <add>, %69, %cst_43 [1] : vector<8x8xf32> to vector<8xf32>
    %71 = vector.shape_cast %70 : vector<8xf32> to vector<8x1xf32>
    %cst_44 = arith.constant dense<0.000000e+00> : vector<8x4xf32>
    %72 = tpu.matmul %69, %63, %cst_44 {dimension_numbers = #tpu.dot_dimension_numbers<[1], [0], [0], [1], [0, 0, 1, 1], [], []>} : vector<8x8xf32>, vector<8x4xf32>, vector<8x4xf32> -> vector<8x4xf32>
    %73 = tpu.reciprocal %71 : vector<8x1xf32> -> vector<8x1xf32>
    %74 = vector.broadcast %73 : vector<8x1xf32> to vector<8x4xf32>
    %75 = arith.mulf %72, %74 : vector<8x4xf32>
    %c0_45 = arith.constant 0 : index
    %c12_46 = arith.constant 12 : index
    %76 = vector.load %arg7[%c0_45, %c12_46] : memref<8x32xf32, #tpu.memory_space<vmem>>, vector<8x4xf32>
    tpu.vector_store %arg7[%c0_45, %c12_46], %75 {strides = array<i32>} : memref<8x32xf32, #tpu.memory_space<vmem>>, vector<8x4xf32>,
    %c0_47 = arith.constant 0 : index
    %c16 = arith.constant 16 : index
    %77 = vector.load %arg6[%c0_47, %c16] : memref<8x96xf32, #tpu.memory_space<vmem>>, vector<8x4xf32>
    %cst_48 = arith.constant 5.000000e-01 : f32
    %78 = vector.broadcast %cst_48 : f32 to vector<8x4xf32>
    %79 = arith.mulf %77, %78 : vector<8x4xf32>
    %c0_49 = arith.constant 0 : index
    %c48 = arith.constant 48 : index
    %80 = vector.load %arg6[%c0_49, %c48] : memref<8x96xf32, #tpu.memory_space<vmem>>, vector<8x4xf32>
    %c0_50 = arith.constant 0 : index
    %c80 = arith.constant 80 : index
    %81 = vector.load %arg6[%c0_50, %c80] : memref<8x96xf32, #tpu.memory_space<vmem>>, vector<8x4xf32>
    %cst_51 = arith.constant dense<0.000000e+00> : vector<8x8xf32>
    %82 = tpu.matmul %79, %80, %cst_51 {dimension_numbers = #tpu.dot_dimension_numbers<[1], [1], [0], [0], [0, 0, 1, 0], [], []>} : vector<8x4xf32>, vector<8x4xf32>, vector<8x8xf32> -> vector<8x8xf32>
    %cst_52 = arith.constant dense<0xFF800000> : vector<8xf32>
    %83 = vector.multi_reduction <maximumf>, %82, %cst_52 [1] : vector<8x8xf32> to vector<8xf32>
    %84 = vector.shape_cast %83 : vector<8xf32> to vector<8x1xf32>
    %85 = vector.broadcast %84 : vector<8x1xf32> to vector<8x8xf32>
    %86 = arith.subf %82, %85 : vector<8x8xf32>
    %87 = math.exp %86 : vector<8x8xf32>
    %cst_53 = arith.constant dense<0.000000e+00> : vector<8xf32>
    %88 = vector.multi_reduction <add>, %87, %cst_53 [1] : vector<8x8xf32> to vector<8xf32>
    %89 = vector.shape_cast %88 : vector<8xf32> to vector<8x1xf32>
    %cst_54 = arith.constant dense<0.000000e+00> : vector<8x4xf32>
    %90 = tpu.matmul %87, %81, %cst_54 {dimension_numbers = #tpu.dot_dimension_numbers<[1], [0], [0], [1], [0, 0, 1, 1], [], []>} : vector<8x8xf32>, vector<8x4xf32>, vector<8x4xf32> -> vector<8x4xf32>
    %91 = tpu.reciprocal %89 : vector<8x1xf32> -> vector<8x1xf32>
    %92 = vector.broadcast %91 : vector<8x1xf32> to vector<8x4xf32>
    %93 = arith.mulf %90, %92 : vector<8x4xf32>
    %c0_55 = arith.constant 0 : index
    %c16_56 = arith.constant 16 : index
    %94 = vector.load %arg7[%c0_55, %c16_56] : memref<8x32xf32, #tpu.memory_space<vmem>>, vector<8x4xf32>
    tpu.vector_store %arg7[%c0_55, %c16_56], %93 {strides = array<i32>} : memref<8x32xf32, #tpu.memory_space<vmem>>, vector<8x4xf32>,
    %c0_57 = arith.constant 0 : index
    %c20 = arith.constant 20 : index
    %95 = vector.load %arg6[%c0_57, %c20] : memref<8x96xf32, #tpu.memory_space<vmem>>, vector<8x4xf32>
    %cst_58 = arith.constant 5.000000e-01 : f32
    %96 = vector.broadcast %cst_58 : f32 to vector<8x4xf32>
    %97 = arith.mulf %95, %96 : vector<8x4xf32>
    %c0_59 = arith.constant 0 : index
    %c52 = arith.constant 52 : index
    %98 = vector.load %arg6[%c0_59, %c52] : memref<8x96xf32, #tpu.memory_space<vmem>>, vector<8x4xf32>
    %c0_60 = arith.constant 0 : index
    %c84 = arith.constant 84 : index
    %99 = vector.load %arg6[%c0_60, %c84] : memref<8x96xf32, #tpu.memory_space<vmem>>, vector<8x4xf32>
    %cst_61 = arith.constant dense<0.000000e+00> : vector<8x8xf32>
    %100 = tpu.matmul %97, %98, %cst_61 {dimension_numbers = #tpu.dot_dimension_numbers<[1], [1], [0], [0], [0, 0, 1, 0], [], []>} : vector<8x4xf32>, vector<8x4xf32>, vector<8x8xf32> -> vector<8x8xf32>
    %cst_62 = arith.constant dense<0xFF800000> : vector<8xf32>
    %101 = vector.multi_reduction <maximumf>, %100, %cst_62 [1] : vector<8x8xf32> to vector<8xf32>
    %102 = vector.shape_cast %101 : vector<8xf32> to vector<8x1xf32>
    %103 = vector.broadcast %102 : vector<8x1xf32> to vector<8x8xf32>
    %104 = arith.subf %100, %103 : vector<8x8xf32>
    %105 = math.exp %104 : vector<8x8xf32>
    %cst_63 = arith.constant dense<0.000000e+00> : vector<8xf32>
    %106 = vector.multi_reduction <add>, %105, %cst_63 [1] : vector<8x8xf32> to vector<8xf32>
    %107 = vector.shape_cast %106 : vector<8xf32> to vector<8x1xf32>
    %cst_64 = arith.constant dense<0.000000e+00> : vector<8x4xf32>
    %108 = tpu.matmul %105, %99, %cst_64 {dimension_numbers = #tpu.dot_dimension_numbers<[1], [0], [0], [1], [0, 0, 1, 1], [], []>} : vector<8x8xf32>, vector<8x4xf32>, vector<8x4xf32> -> vector<8x4xf32>
    %109 = tpu.reciprocal %107 : vector<8x1xf32> -> vector<8x1xf32>
    %110 = vector.broadcast %109 : vector<8x1xf32> to vector<8x4xf32>
    %111 = arith.mulf %108, %110 : vector<8x4xf32>
    %c0_65 = arith.constant 0 : index
    %c20_66 = arith.constant 20 : index
    %112 = vector.load %arg7[%c0_65, %c20_66] : memref<8x32xf32, #tpu.memory_space<vmem>>, vector<8x4xf32>
    tpu.vector_store %arg7[%c0_65, %c20_66], %111 {strides = array<i32>} : memref<8x32xf32, #tpu.memory_space<vmem>>, vector<8x4xf32>,
    %c0_67 = arith.constant 0 : index
    %c24 = arith.constant 24 : index
    %113 = vector.load %arg6[%c0_67, %c24] : memref<8x96xf32, #tpu.memory_space<vmem>>, vector<8x4xf32>
    %cst_68 = arith.constant 5.000000e-01 : f32
    %114 = vector.broadcast %cst_68 : f32 to vector<8x4xf32>
    %115 = arith.mulf %113, %114 : vector<8x4xf32>
    %c0_69 = arith.constant 0 : index
    %c56 = arith.constant 56 : index
    %116 = vector.load %arg6[%c0_69, %c56] : memref<8x96xf32, #tpu.memory_space<vmem>>, vector<8x4xf32>
    %c0_70 = arith.constant 0 : index
    %c88 = arith.constant 88 : index
    %117 = vector.load %arg6[%c0_70, %c88] : memref<8x96xf32, #tpu.memory_space<vmem>>, vector<8x4xf32>
    %cst_71 = arith.constant dense<0.000000e+00> : vector<8x8xf32>
    %118 = tpu.matmul %115, %116, %cst_71 {dimension_numbers = #tpu.dot_dimension_numbers<[1], [1], [0], [0], [0, 0, 1, 0], [], []>} : vector<8x4xf32>, vector<8x4xf32>, vector<8x8xf32> -> vector<8x8xf32>
    %cst_72 = arith.constant dense<0xFF800000> : vector<8xf32>
    %119 = vector.multi_reduction <maximumf>, %118, %cst_72 [1] : vector<8x8xf32> to vector<8xf32>
    %120 = vector.shape_cast %119 : vector<8xf32> to vector<8x1xf32>
    %121 = vector.broadcast %120 : vector<8x1xf32> to vector<8x8xf32>
    %122 = arith.subf %118, %121 : vector<8x8xf32>
    %123 = math.exp %122 : vector<8x8xf32>
    %cst_73 = arith.constant dense<0.000000e+00> : vector<8xf32>
    %124 = vector.multi_reduction <add>, %123, %cst_73 [1] : vector<8x8xf32> to vector<8xf32>
    %125 = vector.shape_cast %124 : vector<8xf32> to vector<8x1xf32>
    %cst_74 = arith.constant dense<0.000000e+00> : vector<8x4xf32>
    %126 = tpu.matmul %123, %117, %cst_74 {dimension_numbers = #tpu.dot_dimension_numbers<[1], [0], [0], [1], [0, 0, 1, 1], [], []>} : vector<8x8xf32>, vector<8x4xf32>, vector<8x4xf32> -> vector<8x4xf32>
    %127 = tpu.reciprocal %125 : vector<8x1xf32> -> vector<8x1xf32>
    %128 = vector.broadcast %127 : vector<8x1xf32> to vector<8x4xf32>
    %129 = arith.mulf %126, %128 : vector<8x4xf32>
    %c0_75 = arith.constant 0 : index
    %c24_76 = arith.constant 24 : index
    %130 = vector.load %arg7[%c0_75, %c24_76] : memref<8x32xf32, #tpu.memory_space<vmem>>, vector<8x4xf32>
    tpu.vector_store %arg7[%c0_75, %c24_76], %129 {strides = array<i32>} : memref<8x32xf32, #tpu.memory_space<vmem>>, vector<8x4xf32>,
    %c0_77 = arith.constant 0 : index
    %c28 = arith.constant 28 : index
    %131 = vector.load %arg6[%c0_77, %c28] : memref<8x96xf32, #tpu.memory_space<vmem>>, vector<8x4xf32>
    %cst_78 = arith.constant 5.000000e-01 : f32
    %132 = vector.broadcast %cst_78 : f32 to vector<8x4xf32>
    %133 = arith.mulf %131, %132 : vector<8x4xf32>
    %c0_79 = arith.constant 0 : index
    %c60 = arith.constant 60 : index
    %134 = vector.load %arg6[%c0_79, %c60] : memref<8x96xf32, #tpu.memory_space<vmem>>, vector<8x4xf32>
    %c0_80 = arith.constant 0 : index
    %c92 = arith.constant 92 : index
    %135 = vector.load %arg6[%c0_80, %c92] : memref<8x96xf32, #tpu.memory_space<vmem>>, vector<8x4xf32>
    %cst_81 = arith.constant dense<0.000000e+00> : vector<8x8xf32>
    %136 = tpu.matmul %133, %134, %cst_81 {dimension_numbers = #tpu.dot_dimension_numbers<[1], [1], [0], [0], [0, 0, 1, 0], [], []>} : vector<8x4xf32>, vector<8x4xf32>, vector<8x8xf32> -> vector<8x8xf32>
    %cst_82 = arith.constant dense<0xFF800000> : vector<8xf32>
    %137 = vector.multi_reduction <maximumf>, %136, %cst_82 [1] : vector<8x8xf32> to vector<8xf32>
    %138 = vector.shape_cast %137 : vector<8xf32> to vector<8x1xf32>
    %139 = vector.broadcast %138 : vector<8x1xf32> to vector<8x8xf32>
    %140 = arith.subf %136, %139 : vector<8x8xf32>
    %141 = math.exp %140 : vector<8x8xf32>
    %cst_83 = arith.constant dense<0.000000e+00> : vector<8xf32>
    %142 = vector.multi_reduction <add>, %141, %cst_83 [1] : vector<8x8xf32> to vector<8xf32>
    %143 = vector.shape_cast %142 : vector<8xf32> to vector<8x1xf32>
    %cst_84 = arith.constant dense<0.000000e+00> : vector<8x4xf32>
    %144 = tpu.matmul %141, %135, %cst_84 {dimension_numbers = #tpu.dot_dimension_numbers<[1], [0], [0], [1], [0, 0, 1, 1], [], []>} : vector<8x8xf32>, vector<8x4xf32>, vector<8x4xf32> -> vector<8x4xf32>
    %145 = tpu.reciprocal %143 : vector<8x1xf32> -> vector<8x1xf32>
    %146 = vector.broadcast %145 : vector<8x1xf32> to vector<8x4xf32>
    %147 = arith.mulf %144, %146 : vector<8x4xf32>
    %c0_85 = arith.constant 0 : index
    %c28_86 = arith.constant 28 : index
    %148 = vector.load %arg7[%c0_85, %c28_86] : memref<8x32xf32, #tpu.memory_space<vmem>>, vector<8x4xf32>
    tpu.vector_store %arg7[%c0_85, %c28_86], %147 {strides = array<i32>} : memref<8x32xf32, #tpu.memory_space<vmem>>, vector<8x4xf32>,
    %c0_87 = arith.constant 0 : index
    %c0_88 = arith.constant 0 : index
    %149 = vector.load %arg7[%c0_87, %c0_88] : memref<8x32xf32, #tpu.memory_space<vmem>>, vector<8x32xf32>
    %c0_89 = arith.constant 0 : index
    %c0_90 = arith.constant 0 : index
    %150 = vector.load %arg3[%c0_89, %c0_90] : memref<32x32xf32, #tpu.memory_space<vmem>>, vector<32x32xf32>
    %cst_91 = arith.constant dense<0.000000e+00> : vector<8x32xf32>
    %151 = tpu.matmul %149, %150, %cst_91 {dimension_numbers = #tpu.dot_dimension_numbers<[1], [1], [0], [0], [0, 0, 1, 0], [], []>} : vector<8x32xf32>, vector<32x32xf32>, vector<8x32xf32> -> vector<8x32xf32>
    %c0_92 = arith.constant 0 : index
    %c0_93 = arith.constant 0 : index
    %152 = vector.load %arg4[%c0_92, %c0_93] : memref<1x32xf32, #tpu.memory_space<vmem>>, vector<1x32xf32>
    %153 = vector.broadcast %152 : vector<1x32xf32> to vector<8x32xf32>
    %154 = arith.addf %151, %153 : vector<8x32xf32>
    %c0_94 = arith.constant 0 : index
    %c0_95 = arith.constant 0 : index
    %c0_96 = arith.constant 0 : index
    %155 = vector.load %arg5[%c0_94, %c0_95, %c0_96] : memref<1x8x32xf32, #tpu.memory_space<vmem>>, vector<1x8x32xf32>
    %156 = vector.shape_cast %155 : vector<1x8x32xf32> to vector<8x32xf32>
    %157 = vector.shape_cast %154 : vector<8x32xf32> to vector<1x8x32xf32>
    tpu.vector_store %arg5[%c0_94, %c0_95, %c0_96], %157 {strides = array<i32>} : memref<1x8x32xf32, #tpu.memory_space<vmem>>, vector<1x8x32xf32>,
    return
  }
  func.func @transform_0(%arg0: i32) -> (i32, i32, i32) {
    %c0_i32 = arith.constant 0 : i32
    %c0_i32_0 = arith.constant 0 : i32
    %c0_i32_1 = arith.constant 0 : i32
    return %arg0, %c0_i32, %c0_i32_0 : i32, i32, i32
  }
  func.func @transform_1(%arg0: i32) -> (i32, i32) {
    %c0_i32 = arith.constant 0 : i32
    %c0_i32_0 = arith.constant 0 : i32
    %c0_i32_1 = arith.constant 0 : i32
    return %c0_i32, %c0_i32_0 : i32, i32
  }
  func.func @transform_2(%arg0: i32) -> (i32, i32) {
    %c0_i32 = arith.constant 0 : i32
    %c0_i32_0 = arith.constant 0 : i32
    %c0_i32_1 = arith.constant 0 : i32
    return %c0_i32, %c0_i32_0 : i32, i32
  }
  func.func @transform_3(%arg0: i32) -> (i32, i32) {
    %c0_i32 = arith.constant 0 : i32
    %c0_i32_0 = arith.constant 0 : i32
    %c0_i32_1 = arith.constant 0 : i32
    return %c0_i32, %c0_i32_0 : i32, i32
  }
  func.func @transform_4(%arg0: i32) -> (i32, i32, i32) {
    %c0_i32 = arith.constant 0 : i32
    %c0_i32_0 = arith.constant 0 : i32
    %c0_i32_1 = arith.constant 0 : i32
    return %arg0, %c0_i32, %c0_i32_0 : i32, i32, i32
  }
}

</mosaic_0001>

<llo_original>
// kernel: attention_forward.1
$region0: #{attention_forward.1}
  #allocation0 [shape = 'u32[]', space=smem, size = 0x4, offset = 0x4, fixed_abs, tag = 'smem constant byte address 0x4 - core index']
  #allocation1 [shape = 'u32[72,128]{1,0:T(1,128)}', space=vmem, size = 0x9000, scoped, tag = 'internal scratch']
  #allocation2 [shape = 'f32[8,96]{1,0:T(8,128)}', space=vmem, size = 0x1000, scoped, tag = 'scratch operand']
  #allocation3 [shape = 'f32[8,32]{1,0:T(8,128)}', space=vmem, size = 0x1000, scoped, tag = 'scratch operand']
  %s0 = inlined_call_operand.vmem [shape: f32[2,8,32], index: 0, kind: input, shape index: {}]
  %s1 = inlined_call_operand.vmem [shape: f32[96,32], index: 1, kind: input, shape index: {}]
  %s2 = inlined_call_operand.vmem [shape: f32[32,32], index: 2, kind: input, shape index: {}]
  %s3 = inlined_call_operand.vmem [shape: f32[1,32], index: 3, kind: input, shape index: {}]
  %s4 = inlined_call_operand.hbm [shape: f32[2,8,32], index: 4, kind: output, shape index: {}]
  %s5 = sld [smem:[#allocation0]]
  $region49: #{attention_forward.1} parent=0
    _
  %s7 = ssub.s32 1, %s5
  %s8 = scalar_select 0, %s7, %s5
  $region1: #{attention_forward.1} parent=0
    #allocation4 [shape = 'u8[8192]{0}', space=vmem, size = 0x2000, scoped, tag = 'output window, operand 0']
    #allocation5 [shape = 's32[2]{0}', space=sflag, size = 0x8, scoped, tag = 'scoped memory for attention_forward.1']
    %9 = vsyncpa [#allocation5], 0
    %s10 = scalar_lea.sflag [#allocation5], 1
    %11 = vsyncpa %s10, 0
    loop: start=0, step=1, limit=4
    $region2: #{attention_forward.1} parent=1 // loop_pre_header
      _
    $region3: #{attention_forward.1} parent=1 // loop_header
      %s13 = sphi 0, %s17
      %p14 = scmp.ge.s32.totalorder %s13, 4
      %s23 = sphi 0, %s25
      %s26 = sphi 0, %s23
      %s27 = sphi 0, %s26
      %s43 = sphi 0, %s27
      %s47 = sphi 0, %s47
      %s49 = sphi 0, %s47
      %s50 = sphi 0, %s49
      %s64 = sphi 0, %s50
      %s68 = sphi 0, %s68
      %s70 = sphi 0, %s68
      %s71 = sphi 0, %s70
      %s85 = sphi 0, %s71
      %s89 = sphi 0, %s89
      %s91 = sphi 0, %s89
      %s92 = sphi 0, %s91
      %s106 = sphi 0, %s92
      %s112 = sphi 0, %s114
      %s115 = sphi 0, %s112
      %s116 = sphi 0, %s115
      %s132 = sphi 0, %s116
    $region4: #{attention_forward.1} parent=1 // loop_header_branch
      %16 = sbr.rel (%p14) target = $region8
    $region5: #{attention_forward.1} parent=1 // loop_body
      %s18 = ssub.s32 %s13, 1
      %s19 = ssub.s32 %s13, 2
      %s20 = sadd.s32 %s13, 1
      %s21 = ssub.s32 %s13, %s20
      %p22 = scmp.eq.s32.totalorder %s21, 0
      %s24 = sadd.s32 %s23, 1
      %s25 = scalar_select %p22, %s23, %s24
      %p28 = pneg %p22
      %p29 = scmp.eq.s32.totalorder %s13, 1
      %p30 = por %p28, %p29
      %p31 = scmp.ne.s32.totalorder %s23, %s26
      %p32 = scmp.eq.s32.totalorder %s13, 0
      %p33 = por %p31, %p32
      %p34 = scmp.ne.s32.totalorder %s23, %s26
      %p35 = scmp.eq.s32.totalorder %s18, 1
      %p36 = por %p34, %p35
      %p37 = scmp.ne.s32.totalorder %s26, %s27
      %p38 = scmp.eq.s32.totalorder %s18, 0
      %p39 = por %p37, %p38
      %p40 = scmp.ne.s32.totalorder %s26, %s27
      %p41 = scmp.eq.s32.totalorder %s19, 1
      %p42 = por %p40, %p41
      %p44 = scmp.ne.s32.totalorder %s27, %s43
      %p45 = scmp.eq.s32.totalorder %s19, 0
      %p46 = por %p44, %p45
      %s48 = sadd.s32 %s47, 1
      %p51 = scmp.eq.s32.totalorder %s13, 1
      %p52 = scmp.ne.s32.totalorder %s47, %s49
      %p53 = scmp.eq.s32.totalorder %s13, 0
      %p54 = por %p52, %p53
      %p55 = scmp.ne.s32.totalorder %s47, %s49
      %p56 = scmp.eq.s32.totalorder %s18, 1
      %p57 = por %p55, %p56
      %p58 = scmp.ne.s32.totalorder %s49, %s50
      %p59 = scmp.eq.s32.totalorder %s18, 0
      %p60 = por %p58, %p59
      %p61 = scmp.ne.s32.totalorder %s49, %s50
      %p62 = scmp.eq.s32.totalorder %s19, 1
      %p63 = por %p61, %p62
      %p65 = scmp.ne.s32.totalorder %s50, %s64
      %p66 = scmp.eq.s32.totalorder %s19, 0
      %p67 = por %p65, %p66
      %s69 = sadd.s32 %s68, 1
      %p72 = scmp.eq.s32.totalorder %s13, 1
      %p73 = scmp.ne.s32.totalorder %s68, %s70
      %p74 = scmp.eq.s32.totalorder %s13, 0
      %p75 = por %p73, %p74
      %p76 = scmp.ne.s32.totalorder %s68, %s70
      %p77 = scmp.eq.s32.totalorder %s18, 1
      %p78 = por %p76, %p77
      %p79 = scmp.ne.s32.totalorder %s70, %s71
      %p80 = scmp.eq.s32.totalorder %s18, 0
      %p81 = por %p79, %p80
      %p82 = scmp.ne.s32.totalorder %s70, %s71
      %p83 = scmp.eq.s32.totalorder %s19, 1
      %p84 = por %p82, %p83
      %p86 = scmp.ne.s32.totalorder %s71, %s85
      %p87 = scmp.eq.s32.totalorder %s19, 0
      %p88 = por %p86, %p87
      %s90 = sadd.s32 %s89, 1
      %p93 = scmp.eq.s32.totalorder %s13, 1
      %p94 = scmp.ne.s32.totalorder %s89, %s91
      %p95 = scmp.eq.s32.totalorder %s13, 0
      %p96 = por %p94, %p95
      %p97 = scmp.ne.s32.totalorder %s89, %s91
      %p98 = scmp.eq.s32.totalorder %s18, 1
      %p99 = por %p97, %p98
      %p100 = scmp.ne.s32.totalorder %s91, %s92
      %p101 = scmp.eq.s32.totalorder %s18, 0
      %p102 = por %p100, %p101
      %p103 = scmp.ne.s32.totalorder %s91, %s92
      %p104 = scmp.eq.s32.totalorder %s19, 1
      %p105 = por %p103, %p104
      %p107 = scmp.ne.s32.totalorder %s92, %s106
      %p108 = scmp.eq.s32.totalorder %s19, 0
      %p109 = por %p107, %p108
      %s110 = ssub.s32 %s13, %s20
      %p111 = scmp.eq.s32.totalorder %s110, 0
      %s113 = sadd.s32 %s112, 1
      %s114 = scalar_select %p111, %s112, %s113
      %p117 = pneg %p111
      %p118 = scmp.eq.s32.totalorder %s13, 1
      %p119 = por %p117, %p118
      %p120 = scmp.ne.s32.totalorder %s112, %s115
      %p121 = scmp.eq.s32.totalorder %s13, 0
      %p122 = por %p120, %p121
      %p123 = scmp.ne.s32.totalorder %s112, %s115
      %p124 = scmp.eq.s32.totalorder %s18, 1
      %p125 = por %p123, %p124
      %p126 = scmp.ne.s32.totalorder %s115, %s116
      %p127 = scmp.eq.s32.totalorder %s18, 0
      %p128 = por %p126, %p127
      %p129 = scmp.ne.s32.totalorder %s115, %s116
      %p130 = scmp.eq.s32.totalorder %s19, 1
      %p131 = por %p129, %p130
      %p133 = scmp.ne.s32.totalorder %s116, %s132
      %p134 = scmp.eq.s32.totalorder %s19, 0
      %p135 = por %p133, %p134
      %p136 = scmp.le.s32.totalorder 1, %s13
      %p137 = scmp.lt.s32.totalorder %s13, 3
      %p138 = pnand %p136, %p137
      %p139 = pneg %p138
      // Predicated region
      $region9: #{attention_forward.1} parent=5 // pred_check
        _
      $region10: #{attention_forward.1} parent=5 // pred_check_branch
        %141 = sbr.rel (%p138) target = $region12
      $region11: #{attention_forward.1} parent=5 // pred_region
        %s142 = ssub.s32 %s13, 1
        // Predicated region
        $region13: #{attention_forward.1} parent=11 // pred_check
          %p143 = pneg %p60
        $region14: #{attention_forward.1} parent=11 // pred_check_branch
          %145 = sbr.rel (%p143) target = $region16
        $region15: #{attention_forward.1} parent=11 // pred_region
          _
        $region16: #{attention_forward.1} parent=11 // pred_fallthru
          _
        // Predicated region
        $region17: #{attention_forward.1} parent=11 // pred_check
          %p146 = pneg %p81
        $region18: #{attention_forward.1} parent=11 // pred_check_branch
          %148 = sbr.rel (%p146) target = $region20
        $region19: #{attention_forward.1} parent=11 // pred_region
          _
        $region20: #{attention_forward.1} parent=11 // pred_fallthru
          _
        // Predicated region
        $region21: #{attention_forward.1} parent=11 // pred_check
          %p149 = pneg %p102
        $region22: #{attention_forward.1} parent=11 // pred_check_branch
          %151 = sbr.rel (%p149) target = $region24
        $region23: #{attention_forward.1} parent=11 // pred_region
          _
        $region24: #{attention_forward.1} parent=11 // pred_fallthru
          _
      $region12: #{attention_forward.1} parent=5 // pred_fallthru
        _
      %p152 = scmp.lt.s32.totalorder %s13, 2
      // Predicated region
      $region25: #{attention_forward.1} parent=5 // pred_check
        %p153 = pneg %p152
      $region26: #{attention_forward.1} parent=5 // pred_check_branch
        %155 = sbr.rel (%p153) target = $region28
      $region27: #{attention_forward.1} parent=5 // pred_region
        // Predicated region
        $region29: #{attention_forward.1} parent=27 // pred_check
          %p156 = pneg %p33
        $region30: #{attention_forward.1} parent=27 // pred_check_branch
          %158 = sbr.rel (%p156) target = $region32
        $region31: #{attention_forward.1} parent=27 // pred_region
          %p159 = scmp.lt.s32.totalorder %s13, 1
          %s160 = scalar_select %p159, %s13, 1
          %s161 = smul.addr %s160, 8
          %s162 = scalar_lea.vmem %s0, %s161
        $region32: #{attention_forward.1} parent=27 // pred_fallthru
          _
      $region28: #{attention_forward.1} parent=5 // pred_fallthru
        _
      %p163 = scmp.le.s32.totalorder 1, %s13
      %p164 = scmp.lt.s32.totalorder %s13, 3
      %p165 = pnand %p163, %p164
      %p166 = pneg %p165
      // Predicated region
      $region33: #{attention_forward.1} parent=5 // pred_check
        _
      $region34: #{attention_forward.1} parent=5 // pred_check_branch
        %168 = sbr.rel (%p165) target = $region36
      $region35: #{attention_forward.1} parent=5 // pred_region
        %s169 = ssub.s32 %s13, 1
        %p170 = scmp.lt.s32.totalorder %s18, 1
        %s171 = scalar_select %p170, %s18, 1
        %s172 = smul.addr %s171, 8
        %s173 = scalar_lea.vmem %s0, %s172
        %p174 = pneg %p39
        %p175 = pneg %p36
        %p176 = pneg %p60
        %p177 = pneg %p57
        %p178 = pneg %p81
        %p179 = pneg %p78
        %p180 = pneg %p102
        %p181 = pneg %p99
        %p182 = pneg %p128
        %p183 = pneg %p125
        %s184 = sand.u32 %s115, 1
        %s185 = scalar_lea.sflag [#allocation5], %s184
        %s186 = sand.u32 %s115, 1
        %s187 = smul.addr %s186, 8
        %s188 = scalar_lea.vmem [#allocation4], %s187
        %p189 = scmp.lt.s32.totalorder %s18, 1
        %s190 = scalar_select %p189, %s18, 1
        %s191 = smul.addr %s190, 8
        %s192 = scalar_lea.vmem %s0, %s191
        %v193 = vld [vmem:[%s192] sm:$0xff]
        %v194 = vld [vmem:[%s1] sm:$0xff]
        %v195 = vld [vmem:[%s1 + $0x8] sm:$0xff]
        %v196 = vld [vmem:[%s1 + $0x10] sm:$0xff]
        %v197 = vld [vmem:[%s1 + $0x18] sm:$0xff]
        %v198 = vld [vmem:[%s1 + $0x20] sm:$0xff]
        %v199 = vld [vmem:[%s1 + $0x28] sm:$0xff]
        %v200 = vld [vmem:[%s1 + $0x30] sm:$0xff]
        %v201 = vld [vmem:[%s1 + $0x38] sm:$0xff]
        %v202 = vld [vmem:[%s1 + $0x40] sm:$0xff]
        %v203 = vld [vmem:[%s1 + $0x48] sm:$0xff]
        %v204 = vld [vmem:[%s1 + $0x50] sm:$0xff]
        %v205 = vld [vmem:[%s1 + $0x58] sm:$0xff]
        %vm206 = vcmask 261120
        %v208 = vsel %vm206, %v193, 0
        %v211 = vsel %vm206, %v194, 0
        %v214 = vsel %vm206, %v195, 0
        %v217 = vsel %vm206, %v196, 0
        %v220 = vsel %vm206, %v197, 0
        %v223 = vsel %vm206, %v198, 0
        %v226 = vsel %vm206, %v199, 0
        %v229 = vsel %vm206, %v200, 0
        %v232 = vsel %vm206, %v201, 0
        %v235 = vsel %vm206, %v202, 0
        %v238 = vsel %vm206, %v203, 0
        %v241 = vsel %vm206, %v204, 0
        %v244 = vsel %vm206, %v205, 0
        %246 = vmatpush.xpose.msra.mxu0 0.0
        %247 = vmatpush.xpose.msra.mxu0 0.0
        %248 = vmatpush.xpose.msra.mxu0 0.0
        %249 = vmatpush.xpose.msra.mxu0 0.0
        %250 = vmatpush.xpose.msra.mxu0 %v244
        %251 = vmatpush.xpose.msra.mxu0 %v241
        %252 = vmatpush.xpose.msra.mxu0 %v238
        %253 = vmatpush.xpose.msra.mxu0 %v235
        %254 = vmatpush.xpose.msra.mxu0 %v232
        %255 = vmatpush.xpose.msra.mxu0 %v229
        %256 = vmatpush.xpose.msra.mxu0 %v226
        %257 = vmatpush.xpose.msra.mxu0 %v223
        %258 = vmatpush.xpose.msra.mxu0 %v220
        %259 = vmatpush.xpose.msra.mxu0 %v217
        %260 = vmatpush.xpose.msra.mxu0 %v214
        %261 = vmatpush.xpose.msra.mxu0 %v211
        %262 = vmatmul.f32.gmra.mxu0 %v208
        %v263 = vpop.f32.mrf.mxu0
        %v264 = vadd.f32 0.0, %v263
        %265 = vdwg.mxu0
        %vm266 = vcmask 785408
        %267 = vst.msk [vmem:[#allocation2] sm:$0xff] %vm266, %v264
        %v268 = vld [vmem:[#allocation2] sm:$0xff]
        %v269 = vmul.f32 %v268, 0.5
        %271 = vrot.lane.b32.xlu0 %v268, 96
        %v272 = vpop.permute.xlu0 %271
        %vm273 = vcmask 31744
        %v275 = vsel %vm273, %v269, 0
        %v277 = vsel %vm273, %v272, 0
        %279 = vmatpush.xpose.msra.mxu0 0.0
        %280 = vmatpush.xpose.msra.mxu0 0.0
        %281 = vmatpush.xpose.msra.mxu0 0.0
        %282 = vmatpush.xpose.msra.mxu0 0.0
        %283 = vmatpush.xpose.msra.mxu0 0.0
        %284 = vmatpush.xpose.msra.mxu0 0.0
        %285 = vmatpush.xpose.msra.mxu0 0.0
        %286 = vmatpush.xpose.msra.mxu0 0.0
        %287 = vmatpush.xpose.msra.mxu0 0.0
        %288 = vmatpush.xpose.msra.mxu0 0.0
        %289 = vmatpush.xpose.msra.mxu0 0.0
        %290 = vmatpush.xpose.msra.mxu0 0.0
        %291 = vmatpush.xpose.msra.mxu0 0.0
        %292 = vmatpush.xpose.msra.mxu0 0.0
        %293 = vmatpush.xpose.msra.mxu0 0.0
        %294 = vmatpush.xpose.msra.mxu0 %v277
        %295 = vmatmul.f32.gmra.mxu0 %v275
        %v296 = vpop.f32.mrf.mxu0
        %v297 = vadd.f32 0.0, %v296
        %298 = vdwg.mxu0
        %vm299 = vcmask 64512
        %v300 = vsel %vm299, %v297, -inf
        %301 = vmax.xlane.f32.xlu0 %v300
        %v302 = vpop.xlane.xlu0 %301
        %v303 = vsub.f32 %v297, %v302
        %v304 = vmul.f32 %v303, 1.442695
        %v305 = vpow.pop %v304
        %v306 = vsel %vm299, %v305, 0.0
        %307 = vadd.xlane.f32.xlu0 %v306
        %v308 = vpop.xlane.xlu0 %307
        %309 = vrot.lane.b32.xlu0 %v268, 64
        %v310 = vpop.permute.xlu0 %309
        %v313 = vsel %vm299, %v305, 0
        %315 = vmatpush.msra.mxu0 0.0
        %316 = vmatpush.msra.mxu0 0.0
        %317 = vmatpush.msra.mxu0 0.0
        %318 = vmatpush.msra.mxu0 0.0
        %319 = vmatpush.msra.mxu0 0.0
        %320 = vmatpush.msra.mxu0 0.0
        %321 = vmatpush.msra.mxu0 0.0
        %322 = vmatpush.msra.mxu0 0.0
        %323 = vmatpush.msra.mxu0 0.0
        %324 = vmatpush.msra.mxu0 0.0
        %325 = vmatpush.msra.mxu0 0.0
        %326 = vmatpush.msra.mxu0 0.0
        %327 = vmatpush.msra.mxu0 0.0
        %328 = vmatpush.msra.mxu0 0.0
        %329 = vmatpush.msra.mxu0 0.0
        %330 = vmatpush.msra.mxu0 %v310
        %331 = vmatmul.f32.gmra.mxu0 %v313
        %v332 = vpop.f32.mrf.mxu0
        %v333 = vadd.f32 0.0, %v332
        %334 = vdwg.mxu0
        %v335 = vrcp.pop %v308
        %v336 = vmul.f32 %v308, %v335
        %v337 = vsub.f32 1.0, %v336
        %v338 = vmul.f32 %v335, %v337
        %v339 = vadd.f32 %v335, %v338
        %vm340 = vweird.f32 %v308
        %vm341 = vweird.f32 %v335
        %vm342 = vmor %vm340, %vm341
        %v343 = vsel %vm342, %v335, %v339
        %v344 = vand.u32 2147483647, %v308
        %vm345 = vcmp.eq.f32.partialorder %v344, 8.507059e+37
        %v346 = vand.u32 %v308, 2147483648
        %v347 = vor.u32 1.1754944e-38, %v346
        %v348 = vsel %vm345, %v347, %v343
        %v349 = vmul.f32 %v333, %v348
        %350 = vst.msk [vmem:[#allocation3] sm:$0xff] %vm273, %v349
        %v351 = vld [vmem:[#allocation2] sm:$0xff]
        %v352 = vmul.f32 %v351, 0.5
        %354 = vrot.lane.b32.xlu0 %v352, 124
        %v355 = vpop.permute.xlu0 %354
        %357 = vrot.lane.b32.xlu0 %v351, 92
        %v358 = vpop.permute.xlu0 %357
        %v359 = vsel %vm273, %v355, 0
        %v361 = vsel %vm273, %v358, 0
        %363 = vmatpush.xpose.msra.mxu0 0.0
        %364 = vmatpush.xpose.msra.mxu0 0.0
        %365 = vmatpush.xpose.msra.mxu0 0.0
        %366 = vmatpush.xpose.msra.mxu0 0.0
        %367 = vmatpush.xpose.msra.mxu0 0.0
        %368 = vmatpush.xpose.msra.mxu0 0.0
        %369 = vmatpush.xpose.msra.mxu0 0.0
        %370 = vmatpush.xpose.msra.mxu0 0.0
        %371 = vmatpush.xpose.msra.mxu0 0.0
        %372 = vmatpush.xpose.msra.mxu0 0.0
        %373 = vmatpush.xpose.msra.mxu0 0.0
        %374 = vmatpush.xpose.msra.mxu0 0.0
        %375 = vmatpush.xpose.msra.mxu0 0.0
        %376 = vmatpush.xpose.msra.mxu0 0.0
        %377 = vmatpush.xpose.msra.mxu0 0.0
        %378 = vmatpush.xpose.msra.mxu0 %v361
        %379 = vmatmul.f32.gmra.mxu0 %v359
        %v380 = vpop.f32.mrf.mxu0
        %v381 = vadd.f32 0.0, %v380
        %382 = vdwg.mxu0
        %v383 = vsel %vm299, %v381, -inf
        %384 = vmax.xlane.f32.xlu0 %v383
        %v385 = vpop.xlane.xlu0 %384
        %v386 = vsub.f32 %v381, %v385
        %v387 = vmul.f32 %v386, 1.442695
        %v388 = vpow.pop %v387
        %v389 = vsel %vm299, %v388, 0.0
        %390 = vadd.xlane.f32.xlu0 %v389
        %v391 = vpop.xlane.xlu0 %390
        %392 = vrot.lane.b32.xlu0 %v351, 60
        %v393 = vpop.permute.xlu0 %392
        %v396 = vsel %vm299, %v388, 0
        %398 = vmatpush.msra.mxu0 0.0
        %399 = vmatpush.msra.mxu0 0.0
        %400 = vmatpush.msra.mxu0 0.0
        %401 = vmatpush.msra.mxu0 0.0
        %402 = vmatpush.msra.mxu0 0.0
        %403 = vmatpush.msra.mxu0 0.0
        %404 = vmatpush.msra.mxu0 0.0
        %405 = vmatpush.msra.mxu0 0.0
        %406 = vmatpush.msra.mxu0 0.0
        %407 = vmatpush.msra.mxu0 0.0
        %408 = vmatpush.msra.mxu0 0.0
        %409 = vmatpush.msra.mxu0 0.0
        %410 = vmatpush.msra.mxu0 0.0
        %411 = vmatpush.msra.mxu0 0.0
        %412 = vmatpush.msra.mxu0 0.0
        %413 = vmatpush.msra.mxu0 %v393
        %414 = vmatmul.f32.gmra.mxu0 %v396
        %v415 = vpop.f32.mrf.mxu0
        %v416 = vadd.f32 0.0, %v415
        %417 = vdwg.mxu0
        %v418 = vrcp.pop %v391
        %v419 = vmul.f32 %v391, %v418
        %v420 = vsub.f32 1.0, %v419
        %v421 = vmul.f32 %v418, %v420
        %v422 = vadd.f32 %v418, %v421
        %vm423 = vweird.f32 %v391
        %vm424 = vweird.f32 %v418
        %vm425 = vmor %vm423, %vm424
        %v426 = vsel %vm425, %v418, %v422
        %v427 = vand.u32 2147483647, %v391
        %vm428 = vcmp.eq.f32.partialorder %v427, 8.507059e+37
        %v429 = vand.u32 %v391, 2147483648
        %v430 = vor.u32 1.1754944e-38, %v429
        %v431 = vsel %vm428, %v430, %v426
        %v432 = vmul.f32 %v416, %v431
        %434 = vrot.lane.b32.xlu0 %v432, 4
        %v435 = vpop.permute.xlu0 %434
        %vm437 = vcmask 64544
        %438 = vst.msk [vmem:[#allocation3] sm:$0xff] %vm437, %v435
        %v439 = vld [vmem:[#allocation2] sm:$0xff]
        %v440 = vmul.f32 %v439, 0.5
        %442 = vrot.lane.b32.xlu0 %v440, 120
        %v443 = vpop.permute.xlu0 %442
        %445 = vrot.lane.b32.xlu0 %v439, 88
        %v446 = vpop.permute.xlu0 %445
        %v447 = vsel %vm273, %v443, 0
        %v449 = vsel %vm273, %v446, 0
        %451 = vmatpush.xpose.msra.mxu0 0.0
        %452 = vmatpush.xpose.msra.mxu0 0.0
        %453 = vmatpush.xpose.msra.mxu0 0.0
        %454 = vmatpush.xpose.msra.mxu0 0.0
        %455 = vmatpush.xpose.msra.mxu0 0.0
        %456 = vmatpush.xpose.msra.mxu0 0.0
        %457 = vmatpush.xpose.msra.mxu0 0.0
        %458 = vmatpush.xpose.msra.mxu0 0.0
        %459 = vmatpush.xpose.msra.mxu0 0.0
        %460 = vmatpush.xpose.msra.mxu0 0.0
        %461 = vmatpush.xpose.msra.mxu0 0.0
        %462 = vmatpush.xpose.msra.mxu0 0.0
        %463 = vmatpush.xpose.msra.mxu0 0.0
        %464 = vmatpush.xpose.msra.mxu0 0.0
        %465 = vmatpush.xpose.msra.mxu0 0.0
        %466 = vmatpush.xpose.msra.mxu0 %v449
        %467 = vmatmul.f32.gmra.mxu0 %v447
        %v468 = vpop.f32.mrf.mxu0
        %v469 = vadd.f32 0.0, %v468
        %470 = vdwg.mxu0
        %v471 = vsel %vm299, %v469, -inf
        %472 = vmax.xlane.f32.xlu0 %v471
        %v473 = vpop.xlane.xlu0 %472
        %v474 = vsub.f32 %v469, %v473
        %v475 = vmul.f32 %v474, 1.442695
        %v476 = vpow.pop %v475
        %v477 = vsel %vm299, %v476, 0.0
        %478 = vadd.xlane.f32.xlu0 %v477
        %v479 = vpop.xlane.xlu0 %478
        %480 = vrot.lane.b32.xlu0 %v439, 56
        %v481 = vpop.permute.xlu0 %480
        %v484 = vsel %vm299, %v476, 0
        %486 = vmatpush.msra.mxu0 0.0
        %487 = vmatpush.msra.mxu0 0.0
        %488 = vmatpush.msra.mxu0 0.0
        %489 = vmatpush.msra.mxu0 0.0
        %490 = vmatpush.msra.mxu0 0.0
        %491 = vmatpush.msra.mxu0 0.0
        %492 = vmatpush.msra.mxu0 0.0
        %493 = vmatpush.msra.mxu0 0.0
        %494 = vmatpush.msra.mxu0 0.0
        %495 = vmatpush.msra.mxu0 0.0
        %496 = vmatpush.msra.mxu0 0.0
        %497 = vmatpush.msra.mxu0 0.0
        %498 = vmatpush.msra.mxu0 0.0
        %499 = vmatpush.msra.mxu0 0.0
        %500 = vmatpush.msra.mxu0 0.0
        %501 = vmatpush.msra.mxu0 %v481
        %502 = vmatmul.f32.gmra.mxu0 %v484
        %v503 = vpop.f32.mrf.mxu0
        %v504 = vadd.f32 0.0, %v503
        %505 = vdwg.mxu0
        %v506 = vrcp.pop %v479
        %v507 = vmul.f32 %v479, %v506
        %v508 = vsub.f32 1.0, %v507
        %v509 = vmul.f32 %v506, %v508
        %v510 = vadd.f32 %v506, %v509
        %vm511 = vweird.f32 %v479
        %vm512 = vweird.f32 %v506
        %vm513 = vmor %vm511, %vm512
        %v514 = vsel %vm513, %v506, %v510
        %v515 = vand.u32 2147483647, %v479
        %vm516 = vcmp.eq.f32.partialorder %v515, 8.507059e+37
        %v517 = vand.u32 %v479, 2147483648
        %v518 = vor.u32 1.1754944e-38, %v517
        %v519 = vsel %vm516, %v518, %v514
        %v520 = vmul.f32 %v504, %v519
        %522 = vrot.lane.b32.xlu0 %v520, 8
        %v523 = vpop.permute.xlu0 %522
        %vm525 = vcmask 97344
        %526 = vst.msk [vmem:[#allocation3] sm:$0xff] %vm525, %v523
        %v527 = vld [vmem:[#allocation2] sm:$0xff]
        %v528 = vmul.f32 %v527, 0.5
        %530 = vrot.lane.b32.xlu0 %v528, 116
        %v531 = vpop.permute.xlu0 %530
        %533 = vrot.lane.b32.xlu0 %v527, 84
        %v534 = vpop.permute.xlu0 %533
        %v535 = vsel %vm273, %v531, 0
        %v537 = vsel %vm273, %v534, 0
        %539 = vmatpush.xpose.msra.mxu0 0.0
        %540 = vmatpush.xpose.msra.mxu0 0.0
        %541 = vmatpush.xpose.msra.mxu0 0.0
        %542 = vmatpush.xpose.msra.mxu0 0.0
        %543 = vmatpush.xpose.msra.mxu0 0.0
        %544 = vmatpush.xpose.msra.mxu0 0.0
        %545 = vmatpush.xpose.msra.mxu0 0.0
        %546 = vmatpush.xpose.msra.mxu0 0.0
        %547 = vmatpush.xpose.msra.mxu0 0.0
        %548 = vmatpush.xpose.msra.mxu0 0.0
        %549 = vmatpush.xpose.msra.mxu0 0.0
        %550 = vmatpush.xpose.msra.mxu0 0.0
        %551 = vmatpush.xpose.msra.mxu0 0.0
        %552 = vmatpush.xpose.msra.mxu0 0.0
        %553 = vmatpush.xpose.msra.mxu0 0.0
        %554 = vmatpush.xpose.msra.mxu0 %v537
        %555 = vmatmul.f32.gmra.mxu0 %v535
        %v556 = vpop.f32.mrf.mxu0
        %v557 = vadd.f32 0.0, %v556
        %558 = vdwg.mxu0
        %v559 = vsel %vm299, %v557, -inf
        %560 = vmax.xlane.f32.xlu0 %v559
        %v561 = vpop.xlane.xlu0 %560
        %v562 = vsub.f32 %v557, %v561
        %v563 = vmul.f32 %v562, 1.442695
        %v564 = vpow.pop %v563
        %v565 = vsel %vm299, %v564, 0.0
        %566 = vadd.xlane.f32.xlu0 %v565
        %v567 = vpop.xlane.xlu0 %566
        %568 = vrot.lane.b32.xlu0 %v527, 52
        %v569 = vpop.permute.xlu0 %568
        %v572 = vsel %vm299, %v564, 0
        %574 = vmatpush.msra.mxu0 0.0
        %575 = vmatpush.msra.mxu0 0.0
        %576 = vmatpush.msra.mxu0 0.0
        %577 = vmatpush.msra.mxu0 0.0
        %578 = vmatpush.msra.mxu0 0.0
        %579 = vmatpush.msra.mxu0 0.0
        %580 = vmatpush.msra.mxu0 0.0
        %581 = vmatpush.msra.mxu0 0.0
        %582 = vmatpush.msra.mxu0 0.0
        %583 = vmatpush.msra.mxu0 0.0
        %584 = vmatpush.msra.mxu0 0.0
        %585 = vmatpush.msra.mxu0 0.0
        %586 = vmatpush.msra.mxu0 0.0
        %587 = vmatpush.msra.mxu0 0.0
        %588 = vmatpush.msra.mxu0 0.0
        %589 = vmatpush.msra.mxu0 %v569
        %590 = vmatmul.f32.gmra.mxu0 %v572
        %v591 = vpop.f32.mrf.mxu0
        %v592 = vadd.f32 0.0, %v591
        %593 = vdwg.mxu0
        %v594 = vrcp.pop %v567
        %v595 = vmul.f32 %v567, %v594
        %v596 = vsub.f32 1.0, %v595
        %v597 = vmul.f32 %v594, %v596
        %v598 = vadd.f32 %v594, %v597
        %vm599 = vweird.f32 %v567
        %vm600 = vweird.f32 %v594
        %vm601 = vmor %vm599, %vm600
        %v602 = vsel %vm601, %v594, %v598
        %v603 = vand.u32 2147483647, %v567
        %vm604 = vcmp.eq.f32.partialorder %v603, 8.507059e+37
        %v605 = vand.u32 %v567, 2147483648
        %v606 = vor.u32 1.1754944e-38, %v605
        %v607 = vsel %vm604, %v606, %v602
        %v608 = vmul.f32 %v592, %v607
        %610 = vrot.lane.b32.xlu0 %v608, 12
        %v611 = vpop.permute.xlu0 %610
        %vm613 = vcmask 130144
        %614 = vst.msk [vmem:[#allocation3] sm:$0xff] %vm613, %v611
        %v615 = vld [vmem:[#allocation2] sm:$0xff]
        %v616 = vmul.f32 %v615, 0.5
        %618 = vrot.lane.b32.xlu0 %v616, 112
        %v619 = vpop.permute.xlu0 %618
        %621 = vrot.lane.b32.xlu0 %v615, 80
        %v622 = vpop.permute.xlu0 %621
        %v623 = vsel %vm273, %v619, 0
        %v625 = vsel %vm273, %v622, 0
        %627 = vmatpush.xpose.msra.mxu0 0.0
        %628 = vmatpush.xpose.msra.mxu0 0.0
        %629 = vmatpush.xpose.msra.mxu0 0.0
        %630 = vmatpush.xpose.msra.mxu0 0.0
        %631 = vmatpush.xpose.msra.mxu0 0.0
        %632 = vmatpush.xpose.msra.mxu0 0.0
        %633 = vmatpush.xpose.msra.mxu0 0.0
        %634 = vmatpush.xpose.msra.mxu0 0.0
        %635 = vmatpush.xpose.msra.mxu0 0.0
        %636 = vmatpush.xpose.msra.mxu0 0.0
        %637 = vmatpush.xpose.msra.mxu0 0.0
        %638 = vmatpush.xpose.msra.mxu0 0.0
        %639 = vmatpush.xpose.msra.mxu0 0.0
        %640 = vmatpush.xpose.msra.mxu0 0.0
        %641 = vmatpush.xpose.msra.mxu0 0.0
        %642 = vmatpush.xpose.msra.mxu0 %v625
        %643 = vmatmul.f32.gmra.mxu0 %v623
        %v644 = vpop.f32.mrf.mxu0
        %v645 = vadd.f32 0.0, %v644
        %646 = vdwg.mxu0
        %v647 = vsel %vm299, %v645, -inf
        %648 = vmax.xlane.f32.xlu0 %v647
        %v649 = vpop.xlane.xlu0 %648
        %v650 = vsub.f32 %v645, %v649
        %v651 = vmul.f32 %v650, 1.442695
        %v652 = vpow.pop %v651
        %v653 = vsel %vm299, %v652, 0.0
        %654 = vadd.xlane.f32.xlu0 %v653
        %v655 = vpop.xlane.xlu0 %654
        %656 = vrot.lane.b32.xlu0 %v615, 48
        %v657 = vpop.permute.xlu0 %656
        %v660 = vsel %vm299, %v652, 0
        %662 = vmatpush.msra.mxu0 0.0
        %663 = vmatpush.msra.mxu0 0.0
        %664 = vmatpush.msra.mxu0 0.0
        %665 = vmatpush.msra.mxu0 0.0
        %666 = vmatpush.msra.mxu0 0.0
        %667 = vmatpush.msra.mxu0 0.0
        %668 = vmatpush.msra.mxu0 0.0
        %669 = vmatpush.msra.mxu0 0.0
        %670 = vmatpush.msra.mxu0 0.0
        %671 = vmatpush.msra.mxu0 0.0
        %672 = vmatpush.msra.mxu0 0.0
        %673 = vmatpush.msra.mxu0 0.0
        %674 = vmatpush.msra.mxu0 0.0
        %675 = vmatpush.msra.mxu0 0.0
        %676 = vmatpush.msra.mxu0 0.0
        %677 = vmatpush.msra.mxu0 %v657
        %678 = vmatmul.f32.gmra.mxu0 %v660
        %v679 = vpop.f32.mrf.mxu0
        %v680 = vadd.f32 0.0, %v679
        %681 = vdwg.mxu0
        %v682 = vrcp.pop %v655
        %v683 = vmul.f32 %v655, %v682
        %v684 = vsub.f32 1.0, %v683
        %v685 = vmul.f32 %v682, %v684
        %v686 = vadd.f32 %v682, %v685
        %vm687 = vweird.f32 %v655
        %vm688 = vweird.f32 %v682
        %vm689 = vmor %vm687, %vm688
        %v690 = vsel %vm689, %v682, %v686
        %v691 = vand.u32 2147483647, %v655
        %vm692 = vcmp.eq.f32.partialorder %v691, 8.507059e+37
        %v693 = vand.u32 %v655, 2147483648
        %v694 = vor.u32 1.1754944e-38, %v693
        %v695 = vsel %vm692, %v694, %v690
        %v696 = vmul.f32 %v680, %v695
        %698 = vrot.lane.b32.xlu0 %v696, 16
        %v699 = vpop.permute.xlu0 %698
        %vm701 = vcmask 162944
        %702 = vst.msk [vmem:[#allocation3] sm:$0xff] %vm701, %v699
        %v703 = vld [vmem:[#allocation2] sm:$0xff]
        %v704 = vmul.f32 %v703, 0.5
        %706 = vrot.lane.b32.xlu0 %v704, 108
        %v707 = vpop.permute.xlu0 %706
        %709 = vrot.lane.b32.xlu0 %v703, 76
        %v710 = vpop.permute.xlu0 %709
        %v711 = vsel %vm273, %v707, 0
        %v713 = vsel %vm273, %v710, 0
        %715 = vmatpush.xpose.msra.mxu0 0.0
        %716 = vmatpush.xpose.msra.mxu0 0.0
        %717 = vmatpush.xpose.msra.mxu0 0.0
        %718 = vmatpush.xpose.msra.mxu0 0.0
        %719 = vmatpush.xpose.msra.mxu0 0.0
        %720 = vmatpush.xpose.msra.mxu0 0.0
        %721 = vmatpush.xpose.msra.mxu0 0.0
        %722 = vmatpush.xpose.msra.mxu0 0.0
        %723 = vmatpush.xpose.msra.mxu0 0.0
        %724 = vmatpush.xpose.msra.mxu0 0.0
        %725 = vmatpush.xpose.msra.mxu0 0.0
        %726 = vmatpush.xpose.msra.mxu0 0.0
        %727 = vmatpush.xpose.msra.mxu0 0.0
        %728 = vmatpush.xpose.msra.mxu0 0.0
        %729 = vmatpush.xpose.msra.mxu0 0.0
        %730 = vmatpush.xpose.msra.mxu0 %v713
        %731 = vmatmul.f32.gmra.mxu0 %v711
        %v732 = vpop.f32.mrf.mxu0
        %v733 = vadd.f32 0.0, %v732
        %734 = vdwg.mxu0
        %v735 = vsel %vm299, %v733, -inf
        %736 = vmax.xlane.f32.xlu0 %v735
        %v737 = vpop.xlane.xlu0 %736
        %v738 = vsub.f32 %v733, %v737
        %v739 = vmul.f32 %v738, 1.442695
        %v740 = vpow.pop %v739
        %v741 = vsel %vm299, %v740, 0.0
        %742 = vadd.xlane.f32.xlu0 %v741
        %v743 = vpop.xlane.xlu0 %742
        %744 = vrot.lane.b32.xlu0 %v703, 44
        %v745 = vpop.permute.xlu0 %744
        %v748 = vsel %vm299, %v740, 0
        %750 = vmatpush.msra.mxu0 0.0
        %751 = vmatpush.msra.mxu0 0.0
        %752 = vmatpush.msra.mxu0 0.0
        %753 = vmatpush.msra.mxu0 0.0
        %754 = vmatpush.msra.mxu0 0.0
        %755 = vmatpush.msra.mxu0 0.0
        %756 = vmatpush.msra.mxu0 0.0
        %757 = vmatpush.msra.mxu0 0.0
        %758 = vmatpush.msra.mxu0 0.0
        %759 = vmatpush.msra.mxu0 0.0
        %760 = vmatpush.msra.mxu0 0.0
        %761 = vmatpush.msra.mxu0 0.0
        %762 = vmatpush.msra.mxu0 0.0
        %763 = vmatpush.msra.mxu0 0.0
        %764 = vmatpush.msra.mxu0 0.0
        %765 = vmatpush.msra.mxu0 %v745
        %766 = vmatmul.f32.gmra.mxu0 %v748
        %v767 = vpop.f32.mrf.mxu0
        %v768 = vadd.f32 0.0, %v767
        %769 = vdwg.mxu0
        %v770 = vrcp.pop %v743
        %v771 = vmul.f32 %v743, %v770
        %v772 = vsub.f32 1.0, %v771
        %v773 = vmul.f32 %v770, %v772
        %v774 = vadd.f32 %v770, %v773
        %vm775 = vweird.f32 %v743
        %vm776 = vweird.f32 %v770
        %vm777 = vmor %vm775, %vm776
        %v778 = vsel %vm777, %v770, %v774
        %v779 = vand.u32 2147483647, %v743
        %vm780 = vcmp.eq.f32.partialorder %v779, 8.507059e+37
        %v781 = vand.u32 %v743, 2147483648
        %v782 = vor.u32 1.1754944e-38, %v781
        %v783 = vsel %vm780, %v782, %v778
        %v784 = vmul.f32 %v768, %v783
        %786 = vrot.lane.b32.xlu0 %v784, 20
        %v787 = vpop.permute.xlu0 %786
        %vm789 = vcmask 195744
        %790 = vst.msk [vmem:[#allocation3] sm:$0xff] %vm789, %v787
        %v791 = vld [vmem:[#allocation2] sm:$0xff]
        %v792 = vmul.f32 %v791, 0.5
        %794 = vrot.lane.b32.xlu0 %v792, 104
        %v795 = vpop.permute.xlu0 %794
        %797 = vrot.lane.b32.xlu0 %v791, 72
        %v798 = vpop.permute.xlu0 %797
        %v799 = vsel %vm273, %v795, 0
        %v801 = vsel %vm273, %v798, 0
        %803 = vmatpush.xpose.msra.mxu0 0.0
        %804 = vmatpush.xpose.msra.mxu0 0.0
        %805 = vmatpush.xpose.msra.mxu0 0.0
        %806 = vmatpush.xpose.msra.mxu0 0.0
        %807 = vmatpush.xpose.msra.mxu0 0.0
        %808 = vmatpush.xpose.msra.mxu0 0.0
        %809 = vmatpush.xpose.msra.mxu0 0.0
        %810 = vmatpush.xpose.msra.mxu0 0.0
        %811 = vmatpush.xpose.msra.mxu0 0.0
        %812 = vmatpush.xpose.msra.mxu0 0.0
        %813 = vmatpush.xpose.msra.mxu0 0.0
        %814 = vmatpush.xpose.msra.mxu0 0.0
        %815 = vmatpush.xpose.msra.mxu0 0.0
        %816 = vmatpush.xpose.msra.mxu0 0.0
        %817 = vmatpush.xpose.msra.mxu0 0.0
        %818 = vmatpush.xpose.msra.mxu0 %v801
        %819 = vmatmul.f32.gmra.mxu0 %v799
        %v820 = vpop.f32.mrf.mxu0
        %v821 = vadd.f32 0.0, %v820
        %822 = vdwg.mxu0
        %v823 = vsel %vm299, %v821, -inf
        %824 = vmax.xlane.f32.xlu0 %v823
        %v825 = vpop.xlane.xlu0 %824
        %v826 = vsub.f32 %v821, %v825
        %v827 = vmul.f32 %v826, 1.442695
        %v828 = vpow.pop %v827
        %v829 = vsel %vm299, %v828, 0.0
        %830 = vadd.xlane.f32.xlu0 %v829
        %v831 = vpop.xlane.xlu0 %830
        %832 = vrot.lane.b32.xlu0 %v791, 40
        %v833 = vpop.permute.xlu0 %832
        %v836 = vsel %vm299, %v828, 0
        %838 = vmatpush.msra.mxu0 0.0
        %839 = vmatpush.msra.mxu0 0.0
        %840 = vmatpush.msra.mxu0 0.0
        %841 = vmatpush.msra.mxu0 0.0
        %842 = vmatpush.msra.mxu0 0.0
        %843 = vmatpush.msra.mxu0 0.0
        %844 = vmatpush.msra.mxu0 0.0
        %845 = vmatpush.msra.mxu0 0.0
        %846 = vmatpush.msra.mxu0 0.0
        %847 = vmatpush.msra.mxu0 0.0
        %848 = vmatpush.msra.mxu0 0.0
        %849 = vmatpush.msra.mxu0 0.0
        %850 = vmatpush.msra.mxu0 0.0
        %851 = vmatpush.msra.mxu0 0.0
        %852 = vmatpush.msra.mxu0 0.0
        %853 = vmatpush.msra.mxu0 %v833
        %854 = vmatmul.f32.gmra.mxu0 %v836
        %v855 = vpop.f32.mrf.mxu0
        %v856 = vadd.f32 0.0, %v855
        %857 = vdwg.mxu0
        %v858 = vrcp.pop %v831
        %v859 = vmul.f32 %v831, %v858
        %v860 = vsub.f32 1.0, %v859
        %v861 = vmul.f32 %v858, %v860
        %v862 = vadd.f32 %v858, %v861
        %vm863 = vweird.f32 %v831
        %vm864 = vweird.f32 %v858
        %vm865 = vmor %vm863, %vm864
        %v866 = vsel %vm865, %v858, %v862
        %v867 = vand.u32 2147483647, %v831
        %vm868 = vcmp.eq.f32.partialorder %v867, 8.507059e+37
        %v869 = vand.u32 %v831, 2147483648
        %v870 = vor.u32 1.1754944e-38, %v869
        %v871 = vsel %vm868, %v870, %v866
        %v872 = vmul.f32 %v856, %v871
        %874 = vrot.lane.b32.xlu0 %v872, 24
        %v875 = vpop.permute.xlu0 %874
        %vm877 = vcmask 228544
        %878 = vst.msk [vmem:[#allocation3] sm:$0xff] %vm877, %v875
        %v879 = vld [vmem:[#allocation2] sm:$0xff]
        %v880 = vmul.f32 %v879, 0.5
        %882 = vrot.lane.b32.xlu0 %v880, 100
        %v883 = vpop.permute.xlu0 %882
        %885 = vrot.lane.b32.xlu0 %v879, 68
        %v886 = vpop.permute.xlu0 %885
        %v887 = vsel %vm273, %v883, 0
        %v889 = vsel %vm273, %v886, 0
        %891 = vmatpush.xpose.msra.mxu0 0.0
        %892 = vmatpush.xpose.msra.mxu0 0.0
        %893 = vmatpush.xpose.msra.mxu0 0.0
        %894 = vmatpush.xpose.msra.mxu0 0.0
        %895 = vmatpush.xpose.msra.mxu0 0.0
        %896 = vmatpush.xpose.msra.mxu0 0.0
        %897 = vmatpush.xpose.msra.mxu0 0.0
        %898 = vmatpush.xpose.msra.mxu0 0.0
        %899 = vmatpush.xpose.msra.mxu0 0.0
        %900 = vmatpush.xpose.msra.mxu0 0.0
        %901 = vmatpush.xpose.msra.mxu0 0.0
        %902 = vmatpush.xpose.msra.mxu0 0.0
        %903 = vmatpush.xpose.msra.mxu0 0.0
        %904 = vmatpush.xpose.msra.mxu0 0.0
        %905 = vmatpush.xpose.msra.mxu0 0.0
        %906 = vmatpush.xpose.msra.mxu0 %v889
        %907 = vmatmul.f32.gmra.mxu0 %v887
        %v908 = vpop.f32.mrf.mxu0
        %v909 = vadd.f32 0.0, %v908
        %910 = vdwg.mxu0
        %v911 = vsel %vm299, %v909, -inf
        %912 = vmax.xlane.f32.xlu0 %v911
        %v913 = vpop.xlane.xlu0 %912
        %v914 = vsub.f32 %v909, %v913
        %v915 = vmul.f32 %v914, 1.442695
        %v916 = vpow.pop %v915
        %v917 = vsel %vm299, %v916, 0.0
        %918 = vadd.xlane.f32.xlu0 %v917
        %v919 = vpop.xlane.xlu0 %918
        %920 = vrot.lane.b32.xlu0 %v879, 36
        %v921 = vpop.permute.xlu0 %920
        %v924 = vsel %vm299, %v916, 0
        %926 = vmatpush.msra.mxu0 0.0
        %927 = vmatpush.msra.mxu0 0.0
        %928 = vmatpush.msra.mxu0 0.0
        %929 = vmatpush.msra.mxu0 0.0
        %930 = vmatpush.msra.mxu0 0.0
        %931 = vmatpush.msra.mxu0 0.0
        %932 = vmatpush.msra.mxu0 0.0
        %933 = vmatpush.msra.mxu0 0.0
        %934 = vmatpush.msra.mxu0 0.0
        %935 = vmatpush.msra.mxu0 0.0
        %936 = vmatpush.msra.mxu0 0.0
        %937 = vmatpush.msra.mxu0 0.0
        %938 = vmatpush.msra.mxu0 0.0
        %939 = vmatpush.msra.mxu0 0.0
        %940 = vmatpush.msra.mxu0 0.0
        %941 = vmatpush.msra.mxu0 %v921
        %942 = vmatmul.f32.gmra.mxu0 %v924
        %v943 = vpop.f32.mrf.mxu0
        %v944 = vadd.f32 0.0, %v943
        %945 = vdwg.mxu0
        %v946 = vrcp.pop %v919
        %v947 = vmul.f32 %v919, %v946
        %v948 = vsub.f32 1.0, %v947
        %v949 = vmul.f32 %v946, %v948
        %v950 = vadd.f32 %v946, %v949
        %vm951 = vweird.f32 %v919
        %vm952 = vweird.f32 %v946
        %vm953 = vmor %vm951, %vm952
        %v954 = vsel %vm953, %v946, %v950
        %v955 = vand.u32 2147483647, %v919
        %vm956 = vcmp.eq.f32.partialorder %v955, 8.507059e+37
        %v957 = vand.u32 %v919, 2147483648
        %v958 = vor.u32 1.1754944e-38, %v957
        %v959 = vsel %vm956, %v958, %v954
        %v960 = vmul.f32 %v944, %v959
        %962 = vrot.lane.b32.xlu0 %v960, 28
        %v963 = vpop.permute.xlu0 %962
        %vm965 = vcmask 261344
        %966 = vst.msk [vmem:[#allocation3] sm:$0xff] %vm965, %v963
        %v967 = vld [vmem:[#allocation3] sm:$0xff]
        %v968 = vld [vmem:[%s2] sm:$0xff]
        %v969 = vld [vmem:[%s2 + $0x8] sm:$0xff]
        %v970 = vld [vmem:[%s2 + $0x10] sm:$0xff]
        %v971 = vld [vmem:[%s2 + $0x18] sm:$0xff]
        %v972 = vld [vmem:[%s3] sm:$0x1]
        %v974 = vperm.slane %v972, 0
        %v977 = vsel %vm206, %v967, 0
        %v980 = vsel %vm206, %v968, 0
        %v983 = vsel %vm206, %v969, 0
        %v986 = vsel %vm206, %v970, 0
        %v989 = vsel %vm206, %v971, 0
        %991 = vmatpush.xpose.msra.mxu0 0.0
        %992 = vmatpush.xpose.msra.mxu0 0.0
        %993 = vmatpush.xpose.msra.mxu0 0.0
        %994 = vmatpush.xpose.msra.mxu0 0.0
        %995 = vmatpush.xpose.msra.mxu0 0.0
        %996 = vmatpush.xpose.msra.mxu0 0.0
        %997 = vmatpush.xpose.msra.mxu0 0.0
        %998 = vmatpush.xpose.msra.mxu0 0.0
        %999 = vmatpush.xpose.msra.mxu0 0.0
        %1000 = vmatpush.xpose.msra.mxu0 0.0
        %1001 = vmatpush.xpose.msra.mxu0 0.0
        %1002 = vmatpush.xpose.msra.mxu0 0.0
        %1003 = vmatpush.xpose.msra.mxu0 %v989
        %1004 = vmatpush.xpose.msra.mxu0 %v986
        %1005 = vmatpush.xpose.msra.mxu0 %v983
        %1006 = vmatpush.xpose.msra.mxu0 %v980
        %1007 = vmatmul.f32.gmra.mxu0 %v977
        %v1008 = vpop.f32.mrf.mxu0
        %v1009 = vadd.f32 %v974, %v1008
        %1010 = vdwg.mxu0
        %1011 = vst.msk [vmem:[%s188] sm:$0xff] %vm206, %v1009
        %s1012 = sand.u32 %s115, 1
        %s1013 = scalar_lea.sflag [#allocation5], %s1012
        %s1014 = sand.u32 %s115, 1
        %s1015 = smul.addr %s1014, 8
        %s1016 = scalar_lea.vmem [#allocation4], %s1015
        // Predicated region
        $region37: #{attention_forward.1} parent=35 // pred_check
          %p1017 = pneg %p125
        $region38: #{attention_forward.1} parent=35 // pred_check_branch
          %1019 = sbr.rel (%p1017) target = $region40
        $region39: #{attention_forward.1} parent=35 // pred_region
          %1021 = vsyncadd %s1013, 0
          %s1022 = smul.addr %s18, 8
          %s1023 = scalar_lea.hbm %s4, %s1022
          %s1025 = sshll.u32 %s1016, 4
          %s1026 = int_to_ptr.vmem [resolvable:$true] %s1025
          %s1027 = sshll.u32 %s1023, 4
          %s1028 = int_to_ptr.hbm [resolvable:$true] %s1027
          %1030 = dma.vmem_to_hbm [thread:$0]  %s1026, 128, %s1028, %s1013
        $region40: #{attention_forward.1} parent=35 // pred_fallthru
          _
      $region36: #{attention_forward.1} parent=5 // pred_fallthru
        _
      %p1031 = scmp.le.s32.totalorder 2, %s13
      // Predicated region
      $region41: #{attention_forward.1} parent=5 // pred_check
        %p1032 = pneg %p1031
      $region42: #{attention_forward.1} parent=5 // pred_check_branch
        %1034 = sbr.rel (%p1032) target = $region44
      $region43: #{attention_forward.1} parent=5 // pred_region
        %s1035 = ssub.s32 %s13, 2
        // Predicated region
        $region45: #{attention_forward.1} parent=43 // pred_check
          %p1036 = pneg %p131
        $region46: #{attention_forward.1} parent=43 // pred_check_branch
          %1038 = sbr.rel (%p1036) target = $region48
        $region47: #{attention_forward.1} parent=43 // pred_region
          %s1039 = sand.u32 %s116, 1
          %s1040 = scalar_lea.sflag [#allocation5], %s1039
          %s1041 = sand.u32 %s116, 1
          %s1042 = smul.addr %s1041, 8
          %s1043 = scalar_lea.vmem [#allocation4], %s1042
          %1045 = dma.done %s1040, 128
        $region48: #{attention_forward.1} parent=43 // pred_fallthru
          _
      $region44: #{attention_forward.1} parent=5 // pred_fallthru
        _
    $region6: #{attention_forward.1} parent=1 // loop_footer
      %s17 = sadd.s32 1, %s13
    $region7: #{attention_forward.1} parent=1 // loop_footer_branch
      %12 = sbr.rel target = $region3
    $region8: #{attention_forward.1} parent=1 // loop_exit
      _
    %1046 = vsyncpa [#allocation5], 1
    %s1047 = scalar_lea.sflag [#allocation5], 1
    %1048 = vsyncpa %s1047, 1

</llo_original>
